<compile_context>
chip_gen: v7x
topology: tpu7x:2x2x1
jax: 0.10.0
libtpu: 0.0.40
codegen_flags: <defaults>
</compile_context>

<pallas_src>
import math

import numpy as np
import jax
import jax.numpy as jnp
from jax import lax
from jax.experimental import pallas as pl
from jax.experimental.pallas import tpu as pltpu

N_FOURIER = 10
_N_RECURRENT = 5          # harmonics 1..5 via VPU recurrence, 6..10 direct on EUP
_TWO_PI = 2.0 * math.pi
# HiDDeN Quantization Fourier-series weights for harmonics k = 1..N_FOURIER:
#   round(t) ~= t + sum_k (-1)^k / (pi*k) * sin(2*pi*k*t)
_QUANT_WEIGHTS = tuple(((-1.0) ** k) / (math.pi * k) for k in range(1, N_FOURIER + 1))


# ----------------------------------------------------------------------------
# tiling helpers
# ----------------------------------------------------------------------------
def _pick_row_tile(rows, row_bytes, target_bytes=2 << 20):
    """Row tile for (rows, lanes) elementwise kernels: ~2 MiB per tile, a
    multiple of 8 sublanes (or the full extent when it is small).  Inputs
    larger than one tile automatically get >=2 grid steps (v7x megacore)."""
    if rows <= 8:
        return rows
    t = (target_bytes // max(row_bytes, 1)) // 8 * 8
    return int(max(8, min((rows // 8) * 8, t)))


def _pick_row_block(rows, cap=256):
    """Largest multiple of 8 that divides `rows` and is <= cap.  This is also
    the sublane-DCT contraction size, so capping it at 256 keeps the row
    matmul at MXU-native width for tall images."""
    t = min((rows // 8) * 8, cap)
    while t >= 8:
        if rows % t == 0:
            return t
        t -= 8
    return rows  # rows < 8 cannot happen (rows % 8 == 0 is asserted upstream)


def _pick_lane_block(lanes, cap=1024):
    """Largest multiple of 128 dividing the lane extent (<= cap); fall back to
    the full extent (a full-extent dim is always a legal block shape)."""
    t = min((lanes // 128) * 128, cap)
    while t >= 128:
        if lanes % t == 0:
            return t
        t -= 128
    return lanes


def _pick_lane_sub(lane_block):
    """In-kernel lane-DCT contraction width: MXU-native 256 (or 128) if it
    divides the lane block, else the full lane block."""
    for k in (256, 128):
        if lane_block % k == 0:
            return k
    return lane_block


# ----------------------------------------------------------------------------
# Quantization: rescale to [0,255], differentiable Fourier rounding, rescale
# ----------------------------------------------------------------------------
def _make_minmax_kernel(total_rows):
    """Fused global min+max reduction (single HBM pass).  Output blocks stay
    resident across the (arbitrary) grid axis and accumulate."""

    def kernel(x_ref, mn_ref, mx_ref):
        i = pl.program_id(0)

        @pl.when(i == 0)
        def _():
            mn_ref[...] = jnp.full((1, 1), jnp.inf, jnp.float32)
            mx_ref[...] = jnp.full((1, 1), -jnp.inf, jnp.float32)

        x = x_ref[...].astype(jnp.float32)
        rt = x.shape[0]
        # Mask rows of a possibly-partial last block (OOB reads are garbage).
        row = lax.broadcasted_iota(jnp.int32, x.shape, 0) + i * rt
        valid = row < total_rows
        xmn = jnp.where(valid, x, jnp.inf)
        xmx = jnp.where(valid, x, -jnp.inf)
        bmn = jnp.min(jnp.min(xmn, axis=1, keepdims=True), axis=0, keepdims=True)
        bmx = jnp.max(jnp.max(xmx, axis=1, keepdims=True), axis=0, keepdims=True)
        mn_ref[...] = jnp.minimum(mn_ref[...], bmn)
        mx_ref[...] = jnp.maximum(mx_ref[...], bmx)

    return kernel


def _global_minmax(x2):
    rows, lanes = x2.shape
    row_tile = _pick_row_tile(rows, lanes * x2.dtype.itemsize, target_bytes=4 << 20)
    mn, mx = pl.pallas_call(
        _make_minmax_kernel(rows),
        out_shape=(jax.ShapeDtypeStruct((1, 1), jnp.float32),
                   jax.ShapeDtypeStruct((1, 1), jnp.float32)),
        grid=(pl.cdiv(rows, row_tile),),
        in_specs=[pl.BlockSpec((row_tile, lanes), lambda i: (i, 0))],
        out_specs=(pl.BlockSpec((1, 1), lambda i: (0, 0)),
                   pl.BlockSpec((1, 1), lambda i: (0, 0))),
        compiler_params=pltpu.CompilerParams(dimension_semantics=("arbitrary",)),
    )(x2)
    return mn[0, 0], mx[0, 0]


def _quantization_kernel(x_ref, p_ref, o_ref):
    # p_ref (SMEM scalars): [x_min, scale (=255/range), inv_scale (=range/255)]
    x = x_ref[...].astype(jnp.float32)
    x_min = p_ref[0]
    scale = p_ref[1]
    inv_scale = p_ref[2]
    t = jnp.clip((x - x_min) * scale, 0.0, 255.0)            # -> [0, 255]

    # Fourier rounding: t + sum_k w_k * sin(2*pi*k*t).
    # Harmonics 1.._N_RECURRENT: angle-addition recurrence
    #   sin(k*th) = 2*cos(th)*sin((k-1)*th) - sin((k-2)*th)   (VPU mul/add only)
    # Harmonics _N_RECURRENT+1..N_FOURIER: direct jnp.sin on the EUP (separate
    # VLIW slot, otherwise idle) -> VALU pressure roughly halved vs. all-recurrence.
    theta = t * jnp.float32(_TWO_PI)
    s_cur = jnp.sin(theta)
    c2 = jnp.cos(theta) * 2.0
    s_prev = jnp.zeros_like(s_cur)
    acc = jnp.float32(_QUANT_WEIGHTS[0]) * s_cur
    for k in range(2, _N_RECURRENT + 1):                      # unrolled
        s_next = c2 * s_cur - s_prev
        acc = acc + jnp.float32(_QUANT_WEIGHTS[k - 1]) * s_next
        s_prev, s_cur = s_cur, s_next
    for k in range(_N_RECURRENT + 1, N_FOURIER + 1):           # unrolled, EUP
        acc = acc + jnp.float32(_QUANT_WEIGHTS[k - 1]) * jnp.sin(
            t * jnp.float32(_TWO_PI * k))
    # TODO(synk): on v7x, doing the recurrence/accumulation in bf16 would pack
    # 2 elems/lane word (~2x VPU) -- kept f32 here so v5e is not penalized.

    o_ref[...] = ((t + acc) * inv_scale + x_min).astype(o_ref.dtype)


def quantization_pallas(x):
    B, C, H, W = x.shape
    x2 = x.reshape(B * C, H * W)            # lane-dense 2D slab (free reshape)
    rows, lanes = x2.shape

    # Global min/max over the whole tensor (matches torch .min()/.max()),
    # fused into a single Pallas reduction pass over HBM.
    x_min, x_max = _global_minmax(x2)
    rng = jnp.maximum(x_max - x_min, jnp.float32(1e-12))
    params = jnp.stack([x_min, jnp.float32(255.0) / rng,
                        rng / jnp.float32(255.0)]).astype(jnp.float32)

    row_tile = _pick_row_tile(rows, lanes * x2.dtype.itemsize)
    out = pl.pallas_call(
        _quantization_kernel,
        out_shape=jax.ShapeDtypeStruct(x2.shape, x2.dtype),
        grid=(pl.cdiv(rows, row_tile),),
        in_specs=[
            pl.BlockSpec((row_tile, lanes), lambda i: (i, 0)),
            pl.BlockSpec(memory_space=pltpu.MemorySpace.SMEM),
        ],
        out_specs=pl.BlockSpec((row_tile, lanes), lambda i: (i, 0)),
        compiler_params=pltpu.CompilerParams(
            dimension_semantics=("parallel",),
            vmem_limit_bytes=48 << 20),       # 2 MiB tiles + f32 temporaries
    )(x2, params)
    return out.reshape(B, C, H, W)


# ----------------------------------------------------------------------------
# JpegCompression (simplified): 8x8 block DCT + low-frequency keep mask
# ----------------------------------------------------------------------------
def _jpeg_kernel(x_ref, d_row_ref, d_row_t_ref, d_col_ref, d_col_t_ref, o_ref):
    # x_ref:      (Rt, Lt)  image slab tile (row/lane blocks are 8-aligned)
    # d_row_ref:  (Rt, Rt)  block-diagonal 8x8 DCT along sublanes, bf16
    # d_row_t_ref:(Rt, Rt)  its transpose (resident; no per-step relayout)
    # d_col_ref:  (K,  K)   block-diagonal 8x8 DCT along lanes, bf16, K<=256
    # d_col_t_ref:(K,  K)   its transpose
    Rt, Lt = x_ref.shape
    K = d_col_ref.shape[0]
    G = Lt // K

    x = x_ref[...].astype(jnp.bfloat16)
    d_row = d_row_ref[...]
    d_row_t = d_row_t_ref[...]
    d_col = d_col_ref[...]
    d_col_t = d_col_t_ref[...]

    # Low-frequency keep mask ((h%8)+(w%8) < 5), generated in-kernel from iota
    # (no constant mask DMA, no resident mask VMEM; cheap VPU filler).
    ri = lax.broadcasted_iota(jnp.int32, (Rt, K), 0) & 7
    ci = lax.broadcasted_iota(jnp.int32, (Rt, K), 1) & 7
    keep = (ri + ci) < 5

    # Row (sublane) 8x8 block DCT of the whole tile: contraction = Rt <= 256.
    t = jnp.dot(d_row, x, preferred_element_type=jnp.float32).astype(jnp.bfloat16)

    # Lane 8x8 block DCT / mask / inverse per MXU-native-width sub-block, so
    # block-diagonal MXU waste is K/8-fold instead of Lt/8-fold.  Each result
    # chunk is stored straight into the lane-aligned output slice.
    for g in range(G):                                         # unrolled, G small
        tg = t[:, g * K:(g + 1) * K]
        cg = jnp.dot(tg, d_col_t, preferred_element_type=jnp.float32)   # . @ Dc^T
        cg = jnp.where(keep, cg, 0.0).astype(jnp.bfloat16)              # drop HF
        zg = jnp.dot(cg, d_col, preferred_element_type=jnp.float32)     # . @ Dc
        yg = jnp.dot(d_row_t, zg.astype(jnp.bfloat16),
                     preferred_element_type=jnp.float32)                # Dr^T @ .
        o_ref[:, g * K:(g + 1) * K] = yg.astype(o_ref.dtype)


def _jpeg_run_2d(x2, d_row, d_row_t, d_col, d_col_t, Rt, Lt):
    R, L = x2.shape
    return pl.pallas_call(
        _jpeg_kernel,
        out_shape=jax.ShapeDtypeStruct((R, L), x2.dtype),
        grid=(R // Rt, L // Lt),
        in_specs=[
            pl.BlockSpec((Rt, Lt), lambda i, j: (i, j)),
            pl.BlockSpec(d_row.shape, lambda i, j: (0, 0)),   # resident constants
            pl.BlockSpec(d_row_t.shape, lambda i, j: (0, 0)),
            pl.BlockSpec(d_col.shape, lambda i, j: (0, 0)),
            pl.BlockSpec(d_col_t.shape, lambda i, j: (0, 0)),
        ],
        out_specs=pl.BlockSpec((Rt, Lt), lambda i, j: (i, j)),
        compiler_params=pltpu.CompilerParams(
            dimension_semantics=("parallel", "parallel")),
    )(x2, d_row, d_row_t, d_col, d_col_t)


# ----------------------------------------------------------------------------
# Noise layers (callables taking [encoded, cover] and returning [noised, cover])
# ----------------------------------------------------------------------------
class Identity:
    """Identity noise: returns the encoded image unchanged (no kernel; a copy
    kernel would only add 2x full-tensor HBM traffic for zero effect)."""

    def __call__(self, encoded_and_cover):
        return [encoded_and_cover[0], encoded_and_cover[1]]


class Quantization:
    def __call__(self, encoded_and_cover):
        return [quantization_pallas(encoded_and_cover[0]), encoded_and_cover[1]]


class JpegCompression:
    # TODO(synk): full HiDDeN JPEG also does RGB->YUV and per-channel zig-zag
    # quality tables; a single triangular low-frequency keep mask per 8x8 block
    # is used here instead.
    def __init__(self):
        k = np.arange(8)[:, None].astype(np.float64)
        n = np.arange(8)[None, :].astype(np.float64)
        d8 = np.cos(np.pi * (2.0 * n + 1.0) * k / 16.0)
        d8[0, :] *= np.sqrt(1.0 / 8.0)
        d8[1:, :] *= np.sqrt(2.0 / 8.0)
        self._d8 = d8                                   # orthonormal 8x8 DCT-II
        self._cache = {}

    def _operands(self, Rt, K):
        key = (Rt, K)
        if key not in self._cache:
            dr = np.kron(np.eye(Rt // 8), self._d8)     # (Rt, Rt)
            dc = np.kron(np.eye(K // 8), self._d8)      # (K, K), K <= 256
            self._cache[key] = tuple(
                jnp.asarray(m, dtype=jnp.bfloat16) for m in (dr, dr.T, dc, dc.T))
        return self._cache[key]

    def _apply_2d(self, x2):
        R, L = x2.shape
        Rt = _pick_row_block(R)          # sublane-DCT contraction, <= 256
        Lt = _pick_lane_block(L)         # DMA tile lane width, <= 1024
        K = _pick_lane_sub(Lt)           # in-kernel lane-DCT contraction
        d_row, d_row_t, d_col, d_col_t = self._operands(Rt, K)
        return _jpeg_run_2d(x2, d_row, d_row_t, d_col, d_col_t, Rt, Lt)

    def __call__(self, encoded_and_cover):
        x = encoded_and_cover[0]
        B, C, H, W = x.shape
        assert H % 8 == 0 and W % 8 == 0
        if W >= 128:
            # NCHW kept as-is: (B*C*H, W) is a free reshape -> no HBM transposes;
            # every 8-row / 8-lane DCT block stays inside one plane (H%8==W%8==0).
            y2 = self._apply_2d(x.reshape(B * C * H, W))
            y = y2.reshape(B, C, H, W)
        else:
            # W too narrow for lane-dense stores: lay planes side by side along
            # the lane axis (pays two wrapper transposes, but keeps the kernel
            # lane-dense, which is the bigger lever for small W).
            x2 = jnp.transpose(x, (2, 0, 1, 3)).reshape(H, B * C * W)
            y2 = self._apply_2d(x2)
            y = y2.reshape(H, B, C, W).transpose(1, 2, 0, 3)
        return [y, encoded_and_cover[1]]


# ----------------------------------------------------------------------------
# Noiser: randomly pick one noise layer and apply it
# ----------------------------------------------------------------------------
class Noiser:
    def __init__(self, noise_layers):
        self.noise_layers = []
        for layer in noise_layers:
            if isinstance(layer, str):
                if layer == "JpegPlaceholder":
                    self.noise_layers.append(JpegCompression())
                elif layer == "QuantizationPlaceholder":
                    self.noise_layers.append(Quantization())
                else:
                    raise ValueError(
                        f"Wrong layer placeholder string in Noiser.__init__(): {layer}")
            else:
                self.noise_layers.append(layer)

    def forward(self, encoded_and_cover):
        random_noise_layer = np.random.choice(self.noise_layers, 1)[0]
        return random_noise_layer(encoded_and_cover)

    __call__ = forward


# ----------------------------------------------------------------------------
# pure-JAX references (correctness checks)
# ----------------------------------------------------------------------------
def _quantization_reference(x):
    xf = x.astype(jnp.float32)
    x_min = jnp.min(xf)
    x_max = jnp.max(xf)
    rng = jnp.maximum(x_max - x_min, jnp.float32(1e-12))
    t = jnp.clip((xf - x_min) * (255.0 / rng), 0.0, 255.0)
    acc = t
    for k in range(1, N_FOURIER + 1):
        acc = acc + jnp.float32(_QUANT_WEIGHTS[k - 1]) * jnp.sin(
            t * jnp.float32(_TWO_PI * k))
    return (acc * (rng / 255.0) + x_min).astype(x.dtype)


def _jpeg_reference(x, d8_np):
    B, C, H, W = x.shape
    dH = jnp.asarray(np.kron(np.eye(H // 8), d8_np), jnp.float32)
    dW = jnp.asarray(np.kron(np.eye(W // 8), d8_np), jnp.float32)
    i, j = np.meshgrid(np.arange(H) % 8, np.arange(W) % 8, indexing="ij")
    mask = jnp.asarray((i + j < 5).astype(np.float32))
    xf = x.astype(jnp.float32)
    coeff = jnp.einsum('rh,bchw,sw->bcrs', dH, xf, dW)
    coeff = coeff * mask
    y = jnp.einsum('rh,bcrs,sw->bchw', dH, coeff, dW)
    return y.astype(x.dtype)


if __name__ == "__main__":
    key = jax.random.PRNGKey(0)
    k1, k2, k3 = jax.random.split(key, 3)
    B, C, H, W = 2, 4, 16, 16
    encoded = jax.random.normal(k1, (B, C, H, W), dtype=jnp.float32)
    cover = jax.random.normal(k2, (B, C, H, W), dtype=jnp.float32)

    np.random.seed(0)  # deterministic random layer choice
    noiser = Noiser(["JpegPlaceholder", "QuantizationPlaceholder", Identity()])

    # The module's forward: one random noise layer applied to the pair.
    out = noiser([encoded, cover])
    jax.block_until_ready(out[0])
    assert out[0].shape == encoded.shape

    # Deterministic coverage of every layer + numerical check vs pure-JAX refs.
    jpeg = next(l for l in noiser.noise_layers if isinstance(l, JpegCompression))
    quant = next(l for l in noiser.noise_layers if isinstance(l, Quantization))
    ident = next(l for l in noiser.noise_layers if isinstance(l, Identity))

    q_out = quant([encoded, cover])[0]
    np.testing.assert_allclose(np.asarray(q_out),
                               np.asarray(_quantization_reference(encoded)),
                               atol=5e-3, rtol=0)

    j_out = jpeg([encoded, cover])[0]        # W=16 < 128 -> lane-slab fallback
    np.testing.assert_allclose(np.asarray(j_out),
                               np.asarray(_jpeg_reference(encoded, jpeg._d8)),
                               atol=0.15, rtol=0)

    i_out = ident([encoded, cover])[0]
    assert i_out is encoded

    # Also exercise the transpose-free NCHW path (W >= 128) and the G>1 lane
    # sub-block loop inside the kernel (Lt=512, K=256 -> two sub-blocks).
    wide = jax.random.normal(k3, (1, 1, 16, 512), dtype=jnp.float32)
    jw = jpeg([wide, wide])[0]
    np.testing.assert_allclose(np.asarray(jw),
                               np.asarray(_jpeg_reference(wide, jpeg._d8)),
                               atol=0.15, rtol=0)
    assert jw.shape == wide.shape and jw.dtype == wide.dtype

    print("KERNEL_OK")
</pallas_src>

<mosaic_0001>
module attributes {stable_mosaic.version = 11 : i64} {
  func.func @_jpeg_kernel(%arg0: i32, %arg1: i32, %arg2: memref<16x128xf32, #tpu.memory_space<vmem>>, %arg3: memref<16x16xbf16, #tpu.memory_space<vmem>>, %arg4: memref<16x16xbf16, #tpu.memory_space<vmem>>, %arg5: memref<128x128xbf16, #tpu.memory_space<vmem>>, %arg6: memref<128x128xbf16, #tpu.memory_space<vmem>>, %arg7: memref<16x128xf32, #tpu.memory_space<vmem>>) attributes {dimension_semantics = [#tpu.dimension_semantics<parallel>, #tpu.dimension_semantics<parallel>], iteration_bounds = array<i64: 1, 1>, scalar_prefetch = 0 : i64, scratch_operands = 0 : i64, tpu.core_type = #tpu.core_type<tc>, window_params = [{transform_indices = @transform_0, window_bounds = array<i64: 16, 128>}, {pipeline_mode = #tpu.pipeline_mode<synchronous>, transform_indices = @transform_1, window_bounds = array<i64: 16, 16>}, {pipeline_mode = #tpu.pipeline_mode<synchronous>, transform_indices = @transform_2, window_bounds = array<i64: 16, 16>}, {pipeline_mode = #tpu.pipeline_mode<synchronous>, transform_indices = @transform_3, window_bounds = array<i64: 128, 128>}, {pipeline_mode = #tpu.pipeline_mode<synchronous>, transform_indices = @transform_4, window_bounds = array<i64: 128, 128>}, {transform_indices = @transform_5, window_bounds = array<i64: 16, 128>}]} {
    %c0 = arith.constant 0 : index
    %c0_0 = arith.constant 0 : index
    %0 = vector.load %arg2[%c0, %c0_0] : memref<16x128xf32, #tpu.memory_space<vmem>>, vector<16x128xf32>
    %1 = arith.truncf %0 : vector<16x128xf32> to vector<16x128xbf16>
    %c0_1 = arith.constant 0 : index
    %c0_2 = arith.constant 0 : index
    %2 = vector.load %arg3[%c0_1, %c0_2] : memref<16x16xbf16, #tpu.memory_space<vmem>>, vector<16x16xbf16>
    %c0_3 = arith.constant 0 : index
    %c0_4 = arith.constant 0 : index
    %3 = vector.load %arg4[%c0_3, %c0_4] : memref<16x16xbf16, #tpu.memory_space<vmem>>, vector<16x16xbf16>
    %c0_5 = arith.constant 0 : index
    %c0_6 = arith.constant 0 : index
    %4 = vector.load %arg5[%c0_5, %c0_6] : memref<128x128xbf16, #tpu.memory_space<vmem>>, vector<128x128xbf16>
    %c0_7 = arith.constant 0 : index
    %c0_8 = arith.constant 0 : index
    %5 = vector.load %arg6[%c0_7, %c0_8] : memref<128x128xbf16, #tpu.memory_space<vmem>>, vector<128x128xbf16>
    %6 = tpu.iota {dimensions = array<i32: 0>} : vector<16x128xi32>
    %c7_i32 = arith.constant 7 : i32
    %7 = vector.broadcast %c7_i32 : i32 to vector<16x128xi32>
    %8 = arith.andi %6, %7 : vector<16x128xi32>
    %9 = tpu.iota {dimensions = array<i32: 1>} : vector<16x128xi32>
    %c7_i32_9 = arith.constant 7 : i32
    %10 = vector.broadcast %c7_i32_9 : i32 to vector<16x128xi32>
    %11 = arith.andi %9, %10 : vector<16x128xi32>
    %12 = arith.addi %8, %11 : vector<16x128xi32>
    %c5_i32 = arith.constant 5 : i32
    %13 = vector.broadcast %c5_i32 : i32 to vector<16x128xi32>
    %14 = arith.cmpi slt, %12, %13 : vector<16x128xi32>
    %cst = arith.constant dense<0.000000e+00> : vector<16x128xf32>
    %15 = tpu.matmul %2, %1, %cst {dimension_numbers = #tpu.dot_dimension_numbers<[1], [0], [0], [1], [0, 0, 1, 1], [], []>} : vector<16x16xbf16>, vector<16x128xbf16>, vector<16x128xf32> -> vector<16x128xf32>
    %16 = arith.truncf %15 : vector<16x128xf32> to vector<16x128xbf16>
    %cst_10 = arith.constant dense<0.000000e+00> : vector<16x128xf32>
    %17 = tpu.matmul %16, %5, %cst_10 {dimension_numbers = #tpu.dot_dimension_numbers<[1], [0], [0], [1], [0, 0, 1, 1], [], []>} : vector<16x128xbf16>, vector<128x128xbf16>, vector<16x128xf32> -> vector<16x128xf32>
    %cst_11 = arith.constant 0.000000e+00 : f32
    %18 = vector.broadcast %cst_11 : f32 to vector<16x128xf32>
    %19 = arith.select %14, %17, %18 : vector<16x128xi1>, vector<16x128xf32>
    %20 = arith.truncf %19 : vector<16x128xf32> to vector<16x128xbf16>
    %cst_12 = arith.constant dense<0.000000e+00> : vector<16x128xf32>
    %21 = tpu.matmul %20, %4, %cst_12 {dimension_numbers = #tpu.dot_dimension_numbers<[1], [0], [0], [1], [0, 0, 1, 1], [], []>} : vector<16x128xbf16>, vector<128x128xbf16>, vector<16x128xf32> -> vector<16x128xf32>
    %22 = arith.truncf %21 : vector<16x128xf32> to vector<16x128xbf16>
    %cst_13 = arith.constant dense<0.000000e+00> : vector<16x128xf32>
    %23 = tpu.matmul %3, %22, %cst_13 {dimension_numbers = #tpu.dot_dimension_numbers<[1], [0], [0], [1], [0, 0, 1, 1], [], []>} : vector<16x16xbf16>, vector<16x128xbf16>, vector<16x128xf32> -> vector<16x128xf32>
    %c0_14 = arith.constant 0 : index
    %c0_15 = arith.constant 0 : index
    %24 = vector.load %arg7[%c0_14, %c0_15] : memref<16x128xf32, #tpu.memory_space<vmem>>, vector<16x128xf32>
    tpu.vector_store %arg7[%c0_14, %c0_15], %23 {strides = array<i32>} : memref<16x128xf32, #tpu.memory_space<vmem>>, vector<16x128xf32>,
    return
  }
  func.func @transform_0(%arg0: i32, %arg1: i32) -> (i32, i32) {
    %c0_i32 = arith.constant 0 : i32
    return %arg0, %arg1 : i32, i32
  }
  func.func @transform_1(%arg0: i32, %arg1: i32) -> (i32, i32) {
    %c0_i32 = arith.constant 0 : i32
    %c0_i32_0 = arith.constant 0 : i32
    %c0_i32_1 = arith.constant 0 : i32
    return %c0_i32, %c0_i32_0 : i32, i32
  }
  func.func @transform_2(%arg0: i32, %arg1: i32) -> (i32, i32) {
    %c0_i32 = arith.constant 0 : i32
    %c0_i32_0 = arith.constant 0 : i32
    %c0_i32_1 = arith.constant 0 : i32
    return %c0_i32, %c0_i32_0 : i32, i32
  }
  func.func @transform_3(%arg0: i32, %arg1: i32) -> (i32, i32) {
    %c0_i32 = arith.constant 0 : i32
    %c0_i32_0 = arith.constant 0 : i32
    %c0_i32_1 = arith.constant 0 : i32
    return %c0_i32, %c0_i32_0 : i32, i32
  }
  func.func @transform_4(%arg0: i32, %arg1: i32) -> (i32, i32) {
    %c0_i32 = arith.constant 0 : i32
    %c0_i32_0 = arith.constant 0 : i32
    %c0_i32_1 = arith.constant 0 : i32
    return %c0_i32, %c0_i32_0 : i32, i32
  }
  func.func @transform_5(%arg0: i32, %arg1: i32) -> (i32, i32) {
    %c0_i32 = arith.constant 0 : i32
    return %arg0, %arg1 : i32, i32
  }
}

</mosaic_0001>

<llo_original>
// kernel: tpu_custom_call.1
$region0: #{tpu_custom_call.1}
  #allocation0 [shape = 'u32[]', space=smem, size = 0x4, offset = 0x4, fixed_abs, tag = 'smem constant byte address 0x4 - core index']
  #allocation1 [shape = 'u32[144,128]{1,0:T(1,128)}', space=vmem, size = 0x12000, scoped, tag = 'internal scratch']
  %s0 = inlined_call_operand.hbm [shape: f32[16,128], index: 0, kind: input, shape index: {}]
  %s1 = inlined_call_operand.hbm [shape: bf16[16,16], index: 1, kind: input, shape index: {}]
  %s2 = inlined_call_operand.hbm [shape: bf16[16,16], index: 2, kind: input, shape index: {}]
  %s3 = inlined_call_operand.hbm [shape: bf16[128,128], index: 3, kind: input, shape index: {}]
  %s4 = inlined_call_operand.hbm [shape: bf16[128,128], index: 4, kind: input, shape index: {}]
  %s5 = inlined_call_operand.hbm [shape: f32[16,128], index: 5, kind: output, shape index: {}]
  %s6 = sld [smem:[#allocation0]]
  $region50: #{tpu_custom_call.1} parent=0
    _
  %s8 = ssub.s32 1, %s6
  %s9 = scalar_select 0, %s8, %s6
  $region1: #{tpu_custom_call.1} parent=0
    #allocation2 [shape = 'u8[8192]{0}', space=vmem, size = 0x2000, scoped, tag = 'input window, operand 0, single buffered']
    #allocation3 [shape = 's32[1]{0}', space=sflag, size = 0x4, scoped, tag = 'scoped memory for tpu_custom_call.1']
    #allocation4 [shape = 's32[1]{0}', space=sflag, size = 0x4, scoped, tag = 'scoped memory for tpu_custom_call.1']
    #allocation5 [shape = 'u8[4096]{0}', space=vmem, size = 0x1000, scoped, tag = 'input window, operand 1, single buffered']
    #allocation6 [shape = 's32[1]{0}', space=sflag, size = 0x4, scoped, tag = 'scoped memory for tpu_custom_call.1']
    #allocation7 [shape = 'u8[4096]{0}', space=vmem, size = 0x1000, scoped, tag = 'input window, operand 2, single buffered']
    #allocation8 [shape = 'u8[32768]{0}', space=vmem, size = 0x8000, scoped, tag = 'input window, operand 3, single buffered']
    #allocation9 [shape = 's32[1]{0}', space=sflag, size = 0x4, scoped, tag = 'scoped memory for tpu_custom_call.1']
    #allocation10 [shape = 'u8[32768]{0}', space=vmem, size = 0x8000, scoped, tag = 'input window, operand 4, single buffered']
    #allocation11 [shape = 'u8[8192]{0}', space=vmem, size = 0x2000, scoped, tag = 'output window, operand 0, single buffered']
    %10 = vsyncpa [#allocation3], 0
    %11 = vsyncpa [#allocation6], 0
    %12 = vsyncpa [#allocation9], 0
    %13 = vsyncpa [#allocation4], 0
    // Predicated region
    $region2: #{tpu_custom_call.1} parent=1 // pred_check
      _
    $region3: #{tpu_custom_call.1} parent=1 // pred_check_branch
      %15 = sbr.rel (0) target = $region5
    $region4: #{tpu_custom_call.1} parent=1 // pred_region
      %s17 = ssub.s32 256, 256
      %18 = vsyncadd [#allocation3], %s17
      %s19 = sshll.u32 [#allocation2], 4
      %s20 = int_to_ptr.vmem [resolvable:$true] %s19
      %25 = dma.hbm_to_vmem [thread:$0]  %s0, 256, %s20, [#allocation3], 128, 128, 8
    $region5: #{tpu_custom_call.1} parent=1 // pred_fallthru
      _
    // Predicated region
    $region6: #{tpu_custom_call.1} parent=1 // pred_check
      _
    $region7: #{tpu_custom_call.1} parent=1 // pred_check_branch
      %27 = sbr.rel (0) target = $region9
    $region8: #{tpu_custom_call.1} parent=1 // pred_region
      %s29 = ssub.s32 128, 128
      %30 = vsyncadd [#allocation6], %s29
      %s31 = sshll.u32 [#allocation5], 4
      %s32 = int_to_ptr.vmem [resolvable:$true] %s31
      %37 = dma.hbm_to_vmem [thread:$0]  %s1, 128, %s32, [#allocation6], 64, 64, 4
    $region9: #{tpu_custom_call.1} parent=1 // pred_fallthru
      _
    // Predicated region
    $region10: #{tpu_custom_call.1} parent=1 // pred_check
      _
    $region11: #{tpu_custom_call.1} parent=1 // pred_check_branch
      %39 = sbr.rel (0) target = $region13
    $region12: #{tpu_custom_call.1} parent=1 // pred_region
      %s41 = ssub.s32 128, 128
      %42 = vsyncadd [#allocation6], %s41
      %s43 = sshll.u32 [#allocation7], 4
      %s44 = int_to_ptr.vmem [resolvable:$true] %s43
      %49 = dma.hbm_to_vmem [thread:$0]  %s2, 128, %s44, [#allocation6], 64, 64, 4
    $region13: #{tpu_custom_call.1} parent=1 // pred_fallthru
      _
    // Predicated region
    $region14: #{tpu_custom_call.1} parent=1 // pred_check
      _
    $region15: #{tpu_custom_call.1} parent=1 // pred_check_branch
      %51 = sbr.rel (0) target = $region17
    $region16: #{tpu_custom_call.1} parent=1 // pred_region
      %s53 = ssub.s32 1024, 1024
      %54 = vsyncadd [#allocation9], %s53
      %s55 = sshll.u32 [#allocation8], 4
      %s56 = int_to_ptr.vmem [resolvable:$true] %s55
      %61 = dma.hbm_to_vmem [thread:$0]  %s3, 1024, %s56, [#allocation9], 64, 64, 4
    $region17: #{tpu_custom_call.1} parent=1 // pred_fallthru
      _
    // Predicated region
    $region18: #{tpu_custom_call.1} parent=1 // pred_check
      _
    $region19: #{tpu_custom_call.1} parent=1 // pred_check_branch
      %63 = sbr.rel (0) target = $region21
    $region20: #{tpu_custom_call.1} parent=1 // pred_region
      %s65 = ssub.s32 1024, 1024
      %66 = vsyncadd [#allocation9], %s65
      %s67 = sshll.u32 [#allocation10], 4
      %s68 = int_to_ptr.vmem [resolvable:$true] %s67
      %73 = dma.hbm_to_vmem [thread:$0]  %s4, 1024, %s68, [#allocation9], 64, 64, 4
    $region21: #{tpu_custom_call.1} parent=1 // pred_fallthru
      _
    // Predicated region
    $region22: #{tpu_custom_call.1} parent=1 // pred_check
      _
    $region23: #{tpu_custom_call.1} parent=1 // pred_check_branch
      %75 = sbr.rel (0) target = $region25
    $region24: #{tpu_custom_call.1} parent=1 // pred_region
      %76 = dma.done [#allocation3], 256
    $region25: #{tpu_custom_call.1} parent=1 // pred_fallthru
      _
    // Predicated region
    $region26: #{tpu_custom_call.1} parent=1 // pred_check
      _
    $region27: #{tpu_custom_call.1} parent=1 // pred_check_branch
      %78 = sbr.rel (0) target = $region29
    $region28: #{tpu_custom_call.1} parent=1 // pred_region
      %79 = dma.done [#allocation6], 128
    $region29: #{tpu_custom_call.1} parent=1 // pred_fallthru
      _
    // Predicated region
    $region30: #{tpu_custom_call.1} parent=1 // pred_check
      _
    $region31: #{tpu_custom_call.1} parent=1 // pred_check_branch
      %81 = sbr.rel (0) target = $region33
    $region32: #{tpu_custom_call.1} parent=1 // pred_region
      %82 = dma.done [#allocation6], 128
    $region33: #{tpu_custom_call.1} parent=1 // pred_fallthru
      _
    // Predicated region
    $region34: #{tpu_custom_call.1} parent=1 // pred_check
      _
    $region35: #{tpu_custom_call.1} parent=1 // pred_check_branch
      %84 = sbr.rel (0) target = $region37
    $region36: #{tpu_custom_call.1} parent=1 // pred_region
      %85 = dma.done [#allocation9], 1024
    $region37: #{tpu_custom_call.1} parent=1 // pred_fallthru
      _
    // Predicated region
    $region38: #{tpu_custom_call.1} parent=1 // pred_check
      _
    $region39: #{tpu_custom_call.1} parent=1 // pred_check_branch
      %87 = sbr.rel (0) target = $region41
    $region40: #{tpu_custom_call.1} parent=1 // pred_region
      %88 = dma.done [#allocation9], 1024
    $region41: #{tpu_custom_call.1} parent=1 // pred_fallthru
      _
    %v90 = vld [vmem:[#allocation2] sm:$0xff]
    %v91 = vld [vmem:[#allocation2 + $0x8] sm:$0xff]
    %v92 = vpack.c.bf16 %v91, %v90
    %v93 = vld [vmem:[#allocation5] sm:$0xf]
    %v94 = vld [vmem:[#allocation5 + $0x4] sm:$0xf]
    %v95 = vld [vmem:[#allocation7] sm:$0xf]
    %v96 = vld [vmem:[#allocation7 + $0x4] sm:$0xf]
    %v97 = vld [vmem:[#allocation8] sm:$0xf]
    %v98 = vld [vmem:[#allocation8 + $0x4] sm:$0xf]
    %v99 = vld [vmem:[#allocation8 + $0x8] sm:$0xf]
    %v100 = vld [vmem:[#allocation8 + $0xc] sm:$0xf]
    %v101 = vld [vmem:[#allocation8 + $0x10] sm:$0xf]
    %v102 = vld [vmem:[#allocation8 + $0x14] sm:$0xf]
    %v103 = vld [vmem:[#allocation8 + $0x18] sm:$0xf]
    %v104 = vld [vmem:[#allocation8 + $0x1c] sm:$0xf]
    %v105 = vld [vmem:[#allocation8 + $0x20] sm:$0xf]
    %v106 = vld [vmem:[#allocation8 + $0x24] sm:$0xf]
    %v107 = vld [vmem:[#allocation8 + $0x28] sm:$0xf]
    %v108 = vld [vmem:[#allocation8 + $0x2c] sm:$0xf]
    %v109 = vld [vmem:[#allocation8 + $0x30] sm:$0xf]
    %v110 = vld [vmem:[#allocation8 + $0x34] sm:$0xf]
    %v111 = vld [vmem:[#allocation8 + $0x38] sm:$0xf]
    %v112 = vld [vmem:[#allocation8 + $0x3c] sm:$0xf]
    %v113 = vld [vmem:[#allocation10] sm:$0xf]
    %v114 = vld [vmem:[#allocation10 + $0x4] sm:$0xf]
    %v115 = vld [vmem:[#allocation10 + $0x8] sm:$0xf]
    %v116 = vld [vmem:[#allocation10 + $0xc] sm:$0xf]
    %v117 = vld [vmem:[#allocation10 + $0x10] sm:$0xf]
    %v118 = vld [vmem:[#allocation10 + $0x14] sm:$0xf]
    %v119 = vld [vmem:[#allocation10 + $0x18] sm:$0xf]
    %v120 = vld [vmem:[#allocation10 + $0x1c] sm:$0xf]
    %v121 = vld [vmem:[#allocation10 + $0x20] sm:$0xf]
    %v122 = vld [vmem:[#allocation10 + $0x24] sm:$0xf]
    %v123 = vld [vmem:[#allocation10 + $0x28] sm:$0xf]
    %v124 = vld [vmem:[#allocation10 + $0x2c] sm:$0xf]
    %v125 = vld [vmem:[#allocation10 + $0x30] sm:$0xf]
    %v126 = vld [vmem:[#allocation10 + $0x34] sm:$0xf]
    %v127 = vld [vmem:[#allocation10 + $0x38] sm:$0xf]
    %v128 = vld [vmem:[#allocation10 + $0x3c] sm:$0xf]
    %v129 = vlaneseq
    %v130 = vshrl.u32 %v129, 7
    %v131 = vadd.s32 %v130, 8
    %v132 = vand.u32 %v130, 7
    %v133 = vand.u32 %v131, 7
    %v134 = vlaneseq
    %v135 = vand.u32 %v134, 127
    %v136 = vand.u32 %v135, 7
    %v137 = vadd.s32 %v132, %v136
    %v138 = vadd.s32 %v133, %v136
    %vm139 = vcmp.lt.s32.totalorder %v137, 5
    %vm140 = vcmp.lt.s32.totalorder %v138, 5
    %v143 = vunpack.c.l.b16 %v93
    %v144 = vunpack.c.l.b16 %v94
    %v145 = vpack.c.b16 %v144, %v143
    %vm146 = vcmask 130048
    %v148 = vsel %vm146, %v145, 0
    %150 = vmatprep.subr.bf16.mxu0 0
    %151 = vmatpush1.bf16.msra.mxu0 %v92
    %152 = vmatprep.subr.bf16.mxu0 0
    %153 = vmatpush1.bf16.msra.mxu0 0
    %154 = vmatprep.subr.bf16.mxu0 0
    %155 = vmatpush1.bf16.msra.mxu0 0
    %156 = vmatprep.subr.bf16.mxu0 0
    %157 = vmatpush1.bf16.msra.mxu0 0
    %158 = vmatprep.subr.bf16.mxu0 0
    %159 = vmatpush1.bf16.msra.mxu0 0
    %160 = vmatprep.subr.bf16.mxu0 0
    %161 = vmatpush1.bf16.msra.mxu0 0
    %162 = vmatprep.subr.bf16.mxu0 0
    %163 = vmatpush1.bf16.msra.mxu0 0
    %164 = vmatprep.subr.bf16.mxu0 0
    %165 = vmatpush1.bf16.msra.mxu0 0
    %166 = vmatprep.subr.bf16.mxu0 0
    %167 = vmatpush1.bf16.msra.mxu0 0
    %168 = vmatprep.subr.bf16.mxu0 0
    %169 = vmatpush1.bf16.msra.mxu0 0
    %170 = vmatprep.subr.bf16.mxu0 0
    %171 = vmatpush1.bf16.msra.mxu0 0
    %172 = vmatprep.subr.bf16.mxu0 0
    %173 = vmatpush1.bf16.msra.mxu0 0
    %174 = vmatprep.subr.bf16.mxu0 0
    %175 = vmatpush1.bf16.msra.mxu0 0
    %176 = vmatprep.subr.bf16.mxu0 0
    %177 = vmatpush1.bf16.msra.mxu0 0
    %178 = vmatprep.subr.bf16.mxu0 0
    %179 = vmatpush1.bf16.msra.mxu0 0
    %180 = vmatprep.subr.bf16.mxu0 0
    %181 = vmatpush1.bf16.msra.mxu0 0
    %182 = vmatprep.mubr.bf16.mxu0 0
    %183 = vmatmul.mubr.bf16.gmra.mrb[0].mxu0 %v148
    %v184 = vpop.f32.mrb[0].mxu0
    %v185 = vadd.f32 0.0, %v184
    %v186 = vpop.f32.mrb[0].mxu0
    %v187 = vpop.f32.mrb[0].mxu0
    %v188 = vadd.f32 0.0, %v187
    %v189 = vpop.f32.mrb[0].mxu0
    %190 = vdwg.mxu0
    %v191 = vpack.c.bf16 %v188, %v185
    %v208 = vunpack.c.l.b16 %v113
    %v209 = vunpack.c.l.b16 %v114
    %v210 = vunpack.c.l.b16 %v115
    %v211 = vunpack.c.l.b16 %v116
    %v212 = vunpack.c.l.b16 %v117
    %v213 = vunpack.c.l.b16 %v118
    %v214 = vunpack.c.l.b16 %v119
    %v215 = vunpack.c.l.b16 %v120
    %v216 = vunpack.c.l.b16 %v121
    %v217 = vunpack.c.l.b16 %v122
    %v218 = vunpack.c.l.b16 %v123
    %v219 = vunpack.c.l.b16 %v124
    %v220 = vunpack.c.l.b16 %v125
    %v221 = vunpack.c.l.b16 %v126
    %v222 = vunpack.c.l.b16 %v127
    %v223 = vunpack.c.l.b16 %v128
    %v224 = vpack.c.b16 %v209, %v208
    %v225 = vpack.c.b16 %v211, %v210
    %v226 = vpack.c.b16 %v213, %v212
    %v227 = vpack.c.b16 %v215, %v214
    %v228 = vpack.c.b16 %v217, %v216
    %v229 = vpack.c.b16 %v219, %v218
    %v230 = vpack.c.b16 %v221, %v220
    %v231 = vpack.c.b16 %v223, %v222
    %240 = vmatprep.subr.bf16.mxu0 0
    %241 = vmatpush1.bf16.msra.mxu0 %v224
    %242 = vmatprep.subr.bf16.mxu0 0
    %243 = vmatpush1.bf16.msra.mxu0 %v225
    %244 = vmatprep.subr.bf16.mxu0 0
    %245 = vmatpush1.bf16.msra.mxu0 %v226
    %246 = vmatprep.subr.bf16.mxu0 0
    %247 = vmatpush1.bf16.msra.mxu0 %v227
    %248 = vmatprep.subr.bf16.mxu0 0
    %249 = vmatpush1.bf16.msra.mxu0 %v228
    %250 = vmatprep.subr.bf16.mxu0 0
    %251 = vmatpush1.bf16.msra.mxu0 %v229
    %252 = vmatprep.subr.bf16.mxu0 0
    %253 = vmatpush1.bf16.msra.mxu0 %v230
    %254 = vmatprep.subr.bf16.mxu0 0
    %255 = vmatpush1.bf16.msra.mxu0 %v231
    %256 = vmatprep.subr.bf16.mxu0 0
    %257 = vmatpush1.bf16.msra.mxu0 0
    %258 = vmatprep.subr.bf16.mxu0 0
    %259 = vmatpush1.bf16.msra.mxu0 0
    %260 = vmatprep.subr.bf16.mxu0 0
    %261 = vmatpush1.bf16.msra.mxu0 0
    %262 = vmatprep.subr.bf16.mxu0 0
    %263 = vmatpush1.bf16.msra.mxu0 0
    %264 = vmatprep.subr.bf16.mxu0 0
    %265 = vmatpush1.bf16.msra.mxu0 0
    %266 = vmatprep.subr.bf16.mxu0 0
    %267 = vmatpush1.bf16.msra.mxu0 0
    %268 = vmatprep.subr.bf16.mxu0 0
    %269 = vmatpush1.bf16.msra.mxu0 0
    %270 = vmatprep.subr.bf16.mxu0 0
    %271 = vmatpush1.bf16.msra.mxu0 0
    %272 = vmatprep.mubr.bf16.mxu0 0
    %273 = vmatmul.mubr.bf16.gmra.mrb[0].mxu0 %v191
    %v274 = vpop.f32.mrb[0].mxu0
    %v275 = vadd.f32 0.0, %v274
    %v276 = vpop.f32.mrb[0].mxu0
    %v277 = vpop.f32.mrb[0].mxu0
    %v278 = vadd.f32 0.0, %v277
    %v279 = vpop.f32.mrb[0].mxu0
    %280 = vdwg.mxu0
    %v281 = vsel %vm139, %v275, 0.0
    %v282 = vsel %vm140, %v278, 0.0
    %v283 = vpack.c.bf16 %v282, %v281
    %v300 = vunpack.c.l.b16 %v97
    %v301 = vunpack.c.l.b16 %v98
    %v302 = vunpack.c.l.b16 %v99
    %v303 = vunpack.c.l.b16 %v100
    %v304 = vunpack.c.l.b16 %v101
    %v305 = vunpack.c.l.b16 %v102
    %v306 = vunpack.c.l.b16 %v103
    %v307 = vunpack.c.l.b16 %v104
    %v308 = vunpack.c.l.b16 %v105
    %v309 = vunpack.c.l.b16 %v106
    %v310 = vunpack.c.l.b16 %v107
    %v311 = vunpack.c.l.b16 %v108
    %v312 = vunpack.c.l.b16 %v109
    %v313 = vunpack.c.l.b16 %v110
    %v314 = vunpack.c.l.b16 %v111
    %v315 = vunpack.c.l.b16 %v112
    %v316 = vpack.c.b16 %v301, %v300
    %v317 = vpack.c.b16 %v303, %v302
    %v318 = vpack.c.b16 %v305, %v304
    %v319 = vpack.c.b16 %v307, %v306
    %v320 = vpack.c.b16 %v309, %v308
    %v321 = vpack.c.b16 %v311, %v310
    %v322 = vpack.c.b16 %v313, %v312
    %v323 = vpack.c.b16 %v315, %v314
    %332 = vmatprep.subr.bf16.mxu0 0
    %333 = vmatpush1.bf16.msra.mxu0 %v316
    %334 = vmatprep.subr.bf16.mxu0 0
    %335 = vmatpush1.bf16.msra.mxu0 %v317
    %336 = vmatprep.subr.bf16.mxu0 0
    %337 = vmatpush1.bf16.msra.mxu0 %v318
    %338 = vmatprep.subr.bf16.mxu0 0
    %339 = vmatpush1.bf16.msra.mxu0 %v319
    %340 = vmatprep.subr.bf16.mxu0 0
    %341 = vmatpush1.bf16.msra.mxu0 %v320
    %342 = vmatprep.subr.bf16.mxu0 0
    %343 = vmatpush1.bf16.msra.mxu0 %v321
    %344 = vmatprep.subr.bf16.mxu0 0
    %345 = vmatpush1.bf16.msra.mxu0 %v322
    %346 = vmatprep.subr.bf16.mxu0 0
    %347 = vmatpush1.bf16.msra.mxu0 %v323
    %348 = vmatprep.subr.bf16.mxu0 0
    %349 = vmatpush1.bf16.msra.mxu0 0
    %350 = vmatprep.subr.bf16.mxu0 0
    %351 = vmatpush1.bf16.msra.mxu0 0
    %352 = vmatprep.subr.bf16.mxu0 0
    %353 = vmatpush1.bf16.msra.mxu0 0
    %354 = vmatprep.subr.bf16.mxu0 0
    %355 = vmatpush1.bf16.msra.mxu0 0
    %356 = vmatprep.subr.bf16.mxu0 0
    %357 = vmatpush1.bf16.msra.mxu0 0
    %358 = vmatprep.subr.bf16.mxu0 0
    %359 = vmatpush1.bf16.msra.mxu0 0
    %360 = vmatprep.subr.bf16.mxu0 0
    %361 = vmatpush1.bf16.msra.mxu0 0
    %362 = vmatprep.subr.bf16.mxu0 0
    %363 = vmatpush1.bf16.msra.mxu0 0
    %364 = vmatprep.mubr.bf16.mxu0 0
    %365 = vmatmul.mubr.bf16.gmra.mrb[0].mxu0 %v283
    %v366 = vpop.f32.mrb[0].mxu0
    %v367 = vadd.f32 0.0, %v366
    %v368 = vpop.f32.mrb[0].mxu0
    %v369 = vpop.f32.mrb[0].mxu0
    %v370 = vadd.f32 0.0, %v369
    %v371 = vpop.f32.mrb[0].mxu0
    %372 = vdwg.mxu0
    %v373 = vpack.c.bf16 %v370, %v367
    %v376 = vunpack.c.l.b16 %v95
    %v377 = vunpack.c.l.b16 %v96
    %v378 = vpack.c.b16 %v377, %v376
    %v380 = vsel %vm146, %v378, 0
    %382 = vmatprep.subr.bf16.mxu0 0
    %383 = vmatpush1.bf16.msra.mxu0 %v373
    %384 = vmatprep.subr.bf16.mxu0 0
    %385 = vmatpush1.bf16.msra.mxu0 0
    %386 = vmatprep.subr.bf16.mxu0 0
    %387 = vmatpush1.bf16.msra.mxu0 0
    %388 = vmatprep.subr.bf16.mxu0 0
    %389 = vmatpush1.bf16.msra.mxu0 0
    %390 = vmatprep.subr.bf16.mxu0 0
    %391 = vmatpush1.bf16.msra.mxu0 0
    %392 = vmatprep.subr.bf16.mxu0 0
    %393 = vmatpush1.bf16.msra.mxu0 0
    %394 = vmatprep.subr.bf16.mxu0 0
    %395 = vmatpush1.bf16.msra.mxu0 0
    %396 = vmatprep.subr.bf16.mxu0 0
    %397 = vmatpush1.bf16.msra.mxu0 0
    %398 = vmatprep.subr.bf16.mxu0 0
    %399 = vmatpush1.bf16.msra.mxu0 0
    %400 = vmatprep.subr.bf16.mxu0 0
    %401 = vmatpush1.bf16.msra.mxu0 0
    %402 = vmatprep.subr.bf16.mxu0 0
    %403 = vmatpush1.bf16.msra.mxu0 0
    %404 = vmatprep.subr.bf16.mxu0 0
    %405 = vmatpush1.bf16.msra.mxu0 0
    %406 = vmatprep.subr.bf16.mxu0 0
    %407 = vmatpush1.bf16.msra.mxu0 0
    %408 = vmatprep.subr.bf16.mxu0 0
    %409 = vmatpush1.bf16.msra.mxu0 0
    %410 = vmatprep.subr.bf16.mxu0 0
    %411 = vmatpush1.bf16.msra.mxu0 0
    %412 = vmatprep.subr.bf16.mxu0 0
    %413 = vmatpush1.bf16.msra.mxu0 0
    %414 = vmatprep.mubr.bf16.mxu0 0
    %415 = vmatmul.mubr.bf16.gmra.mrb[0].mxu0 %v380
    %v416 = vpop.f32.mrb[0].mxu0
    %v417 = vadd.f32 0.0, %v416
    %v418 = vpop.f32.mrb[0].mxu0
    %v419 = vpop.f32.mrb[0].mxu0
    %v420 = vadd.f32 0.0, %v419
    %v421 = vpop.f32.mrb[0].mxu0
    %422 = vdwg.mxu0
    %423 = vst [vmem:[#allocation11] sm:$0xff] %v417
    %424 = vst [vmem:[#allocation11 + $0x8] sm:$0xff] %v420
    // Predicated region
    $region42: #{tpu_custom_call.1} parent=1 // pred_check
      _
    $region43: #{tpu_custom_call.1} parent=1 // pred_check_branch
      %426 = sbr.rel (0) target = $region45
    $region44: #{tpu_custom_call.1} parent=1 // pred_region
      %s428 = ssub.s32 256, 256
      %429 = vsyncadd [#allocation4], %s428
      %s430 = sshll.u32 [#allocation11], 4
      %s431 = int_to_ptr.vmem [resolvable:$true] %s430
      %436 = dma.vmem_to_hbm [thread:$0]  %s431, 256, %s5, [#allocation4], 128, 128, 8
    $region45: #{tpu_custom_call.1} parent=1 // pred_fallthru
      _
    // Predicated region
    $region46: #{tpu_custom_call.1} parent=1 // pred_check
      _
    $region47: #{tpu_custom_call.1} parent=1 // pred_check_branch
      %438 = sbr.rel (0) target = $region49
    $region48: #{tpu_custom_call.1} parent=1 // pred_region
      %439 = dma.done [#allocation4], 256
    $region49: #{tpu_custom_call.1} parent=1 // pred_fallthru
      _
    %440 = vsyncpa [#allocation3], 1
    %441 = vsyncpa [#allocation6], 1
    %442 = vsyncpa [#allocation9], 1
    %443 = vsyncpa [#allocation4], 1

</llo_original>
